<compile_context>
chip_gen: v5e
topology: v5e:2x2
jax: 0.10.0
libtpu: 0.0.40
codegen_flags: <defaults>
</compile_context>

<pallas_src>
import jax
import jax.numpy as jnp
from jax.experimental import pallas as pl
from jax.experimental.pallas import tpu as pltpu

EPS = 1e-5
NEG_SLOPE = 0.01  # nn.LeakyReLU default


def map_kernel(x_ref, w1_ref, vec_ref, w2_ref, o_ref):
    """Single-block fused MLP forward.

    vec_ref packs the small per-feature vectors into one [3, hidden] operand:
      row 0 = gamma, row 1 = beta, row 2[:out_dim] = b2.
    """
    out_dim = o_ref.shape[1]

    # ---- Linear 1: [B, K] @ [K, H], bf16 MXU operands, f32 accumulation ----
    # (b1 omitted: cancelled exactly by training-mode BatchNorm.)
    h = jnp.dot(x_ref[...].astype(jnp.bfloat16), w1_ref[...],
                preferred_element_type=jnp.float32)            # [B, H] f32

    # ---- BatchNorm1d (training-mode batch stats, biased variance), f32 ----
    inv_b = 1.0 / h.shape[0]
    mu = jnp.sum(h, axis=0, keepdims=True) * inv_b             # [1, H]
    ex2 = jnp.sum(h * h, axis=0, keepdims=True) * inv_b        # [1, H]
    var = jnp.maximum(ex2 - mu * mu, 0.0)                      # clamp cancellation
    inv_std = jax.lax.rsqrt(var + EPS)                         # EUP

    # Fold the affine into one per-feature scale/shift so the [B, H]-wide
    # chain is one multiply + one add.
    gamma = vec_ref[0:1, :]
    beta = vec_ref[1:2, :]
    s = inv_std * gamma                                        # [1, H]
    t = beta - mu * s                                          # [1, H]
    hn = h * s + t                                             # [B, H]

    # ---- LeakyReLU: one vmul + one vmax ----
    a = jnp.maximum(hn, NEG_SLOPE * hn)

    # ---- Linear 2: [B, H] @ [H, N] + b2, bf16 MXU operands, f32 acc ----
    out = jnp.dot(a.astype(jnp.bfloat16), w2_ref[...],
                  preferred_element_type=jnp.float32)          # [B, N]
    b2 = vec_ref[2:3, :out_dim]
    o_ref[...] = (out + b2).astype(o_ref.dtype)


def prepare_params(w1, b1, gamma, beta, w2, b2):
    """One-time parameter prep, hoisted out of the per-forward path.

    * w1 / w2 cast to bf16 once (halves weight DMA; MXU-native dtype).
    * gamma / beta / b2 packed into a single [3, hidden] f32 operand.
    * b1 dropped: training-mode BatchNorm mean subtraction cancels it exactly.
    """
    del b1  # cancels under training-mode BN; see TODO(synk) above for eval mode.
    hidden = w1.shape[1]
    out_dim = w2.shape[1]
    vec = jnp.zeros((3, hidden), jnp.float32)
    vec = vec.at[0, :].set(gamma.reshape(-1).astype(jnp.float32))
    vec = vec.at[1, :].set(beta.reshape(-1).astype(jnp.float32))
    vec = vec.at[2, :out_dim].set(b2.reshape(-1).astype(jnp.float32))
    return w1.astype(jnp.bfloat16), vec, w2.astype(jnp.bfloat16)


def map_forward(x, w1_bf16, vec, w2_bf16):
    batch = x.shape[0]
    out_dim = w2_bf16.shape[1]
    # Single grid point; every operand is one full (unpadded) VMEM block.
    # Block shapes equal the full array dims, so the non-128 trailing dims
    # (32 for x/w1's K, 16 for w2/out's N) are legal.
    return pl.pallas_call(
        map_kernel,
        out_shape=jax.ShapeDtypeStruct((batch, out_dim), jnp.float32),
        grid=(1,),
        in_specs=[
            pl.BlockSpec(x.shape, lambda i: (0, 0)),
            pl.BlockSpec(w1_bf16.shape, lambda i: (0, 0)),
            pl.BlockSpec(vec.shape, lambda i: (0, 0)),
            pl.BlockSpec(w2_bf16.shape, lambda i: (0, 0)),
        ],
        out_specs=pl.BlockSpec((batch, out_dim), lambda i: (0, 0)),
        compiler_params=pltpu.CompilerParams(
            # Modest explicit limit -- safe on v5e/v6e (128 MiB) and v7x (64 MiB);
            # total footprint here is < 200 KB.
            vmem_limit_bytes=32 * 1024 * 1024,
        ),
    )(x, w1_bf16, vec, w2_bf16)


def init_params(key, in_dim, hidden_dim, out_dim):
    """Deterministic parameter init mimicking the torch defaults' shapes."""
    k1, k2, k3, k4 = jax.random.split(key, 4)
    lim1 = 1.0 / jnp.sqrt(in_dim)
    w1 = jax.random.uniform(k1, (in_dim, hidden_dim), jnp.float32, -lim1, lim1)
    b1 = jax.random.uniform(k2, (1, hidden_dim), jnp.float32, -lim1, lim1)
    gamma = jnp.ones((1, hidden_dim), jnp.float32)
    beta = jnp.zeros((1, hidden_dim), jnp.float32)
    lim2 = 1.0 / jnp.sqrt(hidden_dim)
    w2 = jax.random.uniform(k3, (hidden_dim, out_dim), jnp.float32, -lim2, lim2)
    b2 = jax.random.uniform(k4, (1, out_dim), jnp.float32, -lim2, lim2)
    return w1, b1, gamma, beta, w2, b2


def map_reference(x, w1, b1, gamma, beta, w2, b2):
    """Pure-JAX f32 reference matching the PyTorch module (training-mode BN)."""
    h = x @ w1 + b1
    mu = jnp.mean(h, axis=0, keepdims=True)
    var = jnp.mean((h - mu) ** 2, axis=0, keepdims=True)
    hn = (h - mu) * jax.lax.rsqrt(var + EPS) * gamma + beta
    a = jnp.where(hn >= 0.0, hn, NEG_SLOPE * hn)
    return a @ w2 + b2


if __name__ == "__main__":
    batch, in_dim, hidden_dim, out_dim = 8, 32, 128, 16

    key = jax.random.PRNGKey(0)
    kx, kp = jax.random.split(key)
    x = jax.random.normal(kx, (batch, in_dim), jnp.float32)
    params = init_params(kp, in_dim, hidden_dim, out_dim)

    # One-time parameter prep (hoisted out of the per-call path).
    w1_bf16, vec, w2_bf16 = prepare_params(*params)

    out = map_forward(x, w1_bf16, vec, w2_bf16)
    jax.block_until_ready(out)

    ref = map_reference(x, *params)
    assert out.shape == (batch, out_dim)
    # Tolerance sized for bf16 MXU operands (f32 accumulation, f32 BN math).
    max_err = float(jnp.max(jnp.abs(out - ref)))
    assert max_err < 5e-2, f"mismatch vs reference: max abs err {max_err}"

    print("KERNEL_OK")
</pallas_src>

<mosaic_0001>
module attributes {stable_mosaic.version = 11 : i64} {
  func.func @map_kernel(%arg0: i32, %arg1: memref<8x32xf32, #tpu.memory_space<vmem>>, %arg2: memref<32x128xbf16, #tpu.memory_space<vmem>>, %arg3: memref<3x128xf32, #tpu.memory_space<vmem>>, %arg4: memref<128x16xbf16, #tpu.memory_space<vmem>>, %arg5: memref<8x16xf32, #tpu.memory_space<vmem>>) attributes {dimension_semantics = [#tpu.dimension_semantics<arbitrary>], iteration_bounds = array<i64: 1>, scalar_prefetch = 0 : i64, scratch_operands = 0 : i64, tpu.core_type = #tpu.core_type<tc>, window_params = [{pipeline_mode = #tpu.pipeline_mode<synchronous>, transform_indices = @transform_0, window_bounds = array<i64: 8, 32>}, {pipeline_mode = #tpu.pipeline_mode<synchronous>, transform_indices = @transform_1, window_bounds = array<i64: 32, 128>}, {pipeline_mode = #tpu.pipeline_mode<synchronous>, transform_indices = @transform_2, window_bounds = array<i64: 3, 128>}, {pipeline_mode = #tpu.pipeline_mode<synchronous>, transform_indices = @transform_3, window_bounds = array<i64: 128, 16>}, {pipeline_mode = #tpu.pipeline_mode<synchronous>, transform_indices = @transform_4, window_bounds = array<i64: 8, 16>}]} {
    %c0 = arith.constant 0 : index
    %c0_0 = arith.constant 0 : index
    %0 = vector.load %arg1[%c0, %c0_0] : memref<8x32xf32, #tpu.memory_space<vmem>>, vector<8x32xf32>
    %1 = arith.truncf %0 : vector<8x32xf32> to vector<8x32xbf16>
    %c0_1 = arith.constant 0 : index
    %c0_2 = arith.constant 0 : index
    %2 = vector.load %arg2[%c0_1, %c0_2] : memref<32x128xbf16, #tpu.memory_space<vmem>>, vector<32x128xbf16>
    %cst = arith.constant dense<0.000000e+00> : vector<8x128xf32>
    %3 = tpu.matmul %1, %2, %cst {dimension_numbers = #tpu.dot_dimension_numbers<[1], [0], [0], [1], [0, 0, 1, 1], [], []>} : vector<8x32xbf16>, vector<32x128xbf16>, vector<8x128xf32> -> vector<8x128xf32>
    %cst_3 = arith.constant dense<0.000000e+00> : vector<128xf32>
    %4 = vector.multi_reduction <add>, %3, %cst_3 [0] : vector<8x128xf32> to vector<128xf32>
    %5 = vector.shape_cast %4 : vector<128xf32> to vector<1x128xf32>
    %cst_4 = arith.constant 1.250000e-01 : f32
    %6 = vector.broadcast %cst_4 : f32 to vector<1x128xf32>
    %7 = arith.mulf %5, %6 : vector<1x128xf32>
    %8 = arith.mulf %3, %3 : vector<8x128xf32>
    %cst_5 = arith.constant dense<0.000000e+00> : vector<128xf32>
    %9 = vector.multi_reduction <add>, %8, %cst_5 [0] : vector<8x128xf32> to vector<128xf32>
    %10 = vector.shape_cast %9 : vector<128xf32> to vector<1x128xf32>
    %cst_6 = arith.constant 1.250000e-01 : f32
    %11 = vector.broadcast %cst_6 : f32 to vector<1x128xf32>
    %12 = arith.mulf %10, %11 : vector<1x128xf32>
    %13 = arith.mulf %7, %7 : vector<1x128xf32>
    %14 = arith.subf %12, %13 : vector<1x128xf32>
    %cst_7 = arith.constant 0.000000e+00 : f32
    %15 = vector.broadcast %cst_7 : f32 to vector<1x128xf32>
    %16 = arith.maximumf %14, %15 : vector<1x128xf32>
    %cst_8 = arith.constant 9.99999974E-6 : f32
    %17 = vector.broadcast %cst_8 : f32 to vector<1x128xf32>
    %18 = arith.addf %16, %17 : vector<1x128xf32>
    %19 = math.rsqrt %18 : vector<1x128xf32>
    %c0_9 = arith.constant 0 : index
    %c0_10 = arith.constant 0 : index
    %20 = vector.load %arg3[%c0_9, %c0_10] : memref<3x128xf32, #tpu.memory_space<vmem>>, vector<1x128xf32>
    %c1 = arith.constant 1 : index
    %c0_11 = arith.constant 0 : index
    %21 = vector.load %arg3[%c1, %c0_11] : memref<3x128xf32, #tpu.memory_space<vmem>>, vector<1x128xf32>
    %22 = arith.mulf %19, %20 : vector<1x128xf32>
    %23 = arith.mulf %7, %22 : vector<1x128xf32>
    %24 = arith.subf %21, %23 : vector<1x128xf32>
    %25 = vector.broadcast %22 : vector<1x128xf32> to vector<8x128xf32>
    %26 = arith.mulf %3, %25 : vector<8x128xf32>
    %27 = vector.broadcast %24 : vector<1x128xf32> to vector<8x128xf32>
    %28 = arith.addf %26, %27 : vector<8x128xf32>
    %cst_12 = arith.constant 0.00999999977 : f32
    %29 = vector.broadcast %cst_12 : f32 to vector<8x128xf32>
    %30 = arith.mulf %29, %28 : vector<8x128xf32>
    %31 = arith.maximumf %28, %30 : vector<8x128xf32>
    %32 = arith.truncf %31 : vector<8x128xf32> to vector<8x128xbf16>
    %c0_13 = arith.constant 0 : index
    %c0_14 = arith.constant 0 : index
    %33 = vector.load %arg4[%c0_13, %c0_14] : memref<128x16xbf16, #tpu.memory_space<vmem>>, vector<128x16xbf16>
    %cst_15 = arith.constant dense<0.000000e+00> : vector<8x16xf32>
    %34 = tpu.matmul %32, %33, %cst_15 {dimension_numbers = #tpu.dot_dimension_numbers<[1], [0], [0], [1], [0, 0, 1, 1], [], []>} : vector<8x128xbf16>, vector<128x16xbf16>, vector<8x16xf32> -> vector<8x16xf32>
    %c2 = arith.constant 2 : index
    %c0_16 = arith.constant 0 : index
    %35 = vector.load %arg3[%c2, %c0_16] : memref<3x128xf32, #tpu.memory_space<vmem>>, vector<1x16xf32>
    %36 = vector.broadcast %35 : vector<1x16xf32> to vector<8x16xf32>
    %37 = arith.addf %34, %36 : vector<8x16xf32>
    %c0_17 = arith.constant 0 : index
    %c0_18 = arith.constant 0 : index
    %38 = vector.load %arg5[%c0_17, %c0_18] : memref<8x16xf32, #tpu.memory_space<vmem>>, vector<8x16xf32>
    tpu.vector_store %arg5[%c0_17, %c0_18], %37 {strides = array<i32>} : memref<8x16xf32, #tpu.memory_space<vmem>>, vector<8x16xf32>,
    return
  }
  func.func @transform_0(%arg0: i32) -> (i32, i32) {
    %c0_i32 = arith.constant 0 : i32
    %c0_i32_0 = arith.constant 0 : i32
    %c0_i32_1 = arith.constant 0 : i32
    return %c0_i32, %c0_i32_0 : i32, i32
  }
  func.func @transform_1(%arg0: i32) -> (i32, i32) {
    %c0_i32 = arith.constant 0 : i32
    %c0_i32_0 = arith.constant 0 : i32
    %c0_i32_1 = arith.constant 0 : i32
    return %c0_i32, %c0_i32_0 : i32, i32
  }
  func.func @transform_2(%arg0: i32) -> (i32, i32) {
    %c0_i32 = arith.constant 0 : i32
    %c0_i32_0 = arith.constant 0 : i32
    %c0_i32_1 = arith.constant 0 : i32
    return %c0_i32, %c0_i32_0 : i32, i32
  }
  func.func @transform_3(%arg0: i32) -> (i32, i32) {
    %c0_i32 = arith.constant 0 : i32
    %c0_i32_0 = arith.constant 0 : i32
    %c0_i32_1 = arith.constant 0 : i32
    return %c0_i32, %c0_i32_0 : i32, i32
  }
  func.func @transform_4(%arg0: i32) -> (i32, i32) {
    %c0_i32 = arith.constant 0 : i32
    %c0_i32_0 = arith.constant 0 : i32
    %c0_i32_1 = arith.constant 0 : i32
    return %c0_i32, %c0_i32_0 : i32, i32
  }
}

</mosaic_0001>

<llo_original>
// kernel: tpu_custom_call.1
$region0: #{tpu_custom_call.1}
  #allocation0 [shape = 'u32[]', space=smem, size = 0x4, offset = 0x4, fixed_abs, tag = 'smem constant byte address 0x4 - core index']
  #allocation1 [shape = 'u32[72,128]{1,0:T(1,128)}', space=vmem, size = 0x9000, scoped, tag = 'internal scratch']
  %s0 = inlined_call_operand.vmem [shape: f32[8,32], index: 0, kind: input, shape index: {}]
  %s1 = inlined_call_operand.vmem [shape: bf16[32,128], index: 1, kind: input, shape index: {}]
  %s2 = inlined_call_operand.vmem [shape: f32[3,128], index: 2, kind: input, shape index: {}]
  %s3 = inlined_call_operand.vmem [shape: bf16[128,16], index: 3, kind: input, shape index: {}]
  %s4 = inlined_call_operand.hbm [shape: f32[8,16], index: 4, kind: output, shape index: {}]
  %s5 = sld [smem:[#allocation0]]
  $region26: #{tpu_custom_call.1} parent=0
    _
  %s7 = ssub.s32 1, %s5
  %s8 = scalar_select 0, %s7, %s5
  $region1: #{tpu_custom_call.1} parent=0
    #allocation2 [shape = 'u8[4096]{0}', space=vmem, size = 0x1000, scoped, tag = 'output window, operand 0, single buffered']
    #allocation3 [shape = 's32[1]{0}', space=sflag, size = 0x4, scoped, tag = 'scoped memory for tpu_custom_call.1']
    %9 = vsyncpa [#allocation3], 0
    // Predicated region
    $region2: #{tpu_custom_call.1} parent=1 // pred_check
      _
    $region3: #{tpu_custom_call.1} parent=1 // pred_check_branch
      %11 = sbr.rel (0) target = $region5
    $region4: #{tpu_custom_call.1} parent=1 // pred_region
      _
    $region5: #{tpu_custom_call.1} parent=1 // pred_fallthru
      _
    // Predicated region
    $region6: #{tpu_custom_call.1} parent=1 // pred_check
      _
    $region7: #{tpu_custom_call.1} parent=1 // pred_check_branch
      %13 = sbr.rel (0) target = $region9
    $region8: #{tpu_custom_call.1} parent=1 // pred_region
      _
    $region9: #{tpu_custom_call.1} parent=1 // pred_fallthru
      _
    // Predicated region
    $region10: #{tpu_custom_call.1} parent=1 // pred_check
      _
    $region11: #{tpu_custom_call.1} parent=1 // pred_check_branch
      %15 = sbr.rel (0) target = $region13
    $region12: #{tpu_custom_call.1} parent=1 // pred_region
      _
    $region13: #{tpu_custom_call.1} parent=1 // pred_fallthru
      _
    // Predicated region
    $region14: #{tpu_custom_call.1} parent=1 // pred_check
      _
    $region15: #{tpu_custom_call.1} parent=1 // pred_check_branch
      %17 = sbr.rel (0) target = $region17
    $region16: #{tpu_custom_call.1} parent=1 // pred_region
      _
    $region17: #{tpu_custom_call.1} parent=1 // pred_fallthru
      _
    %v19 = vld [vmem:[%s0] sm:$0xff]
    %v20 = vpack.c.bf16 %v19, %v19
    %v21 = vld [vmem:[%s1] sm:$0xf]
    %v22 = vld [vmem:[%s1 + $0x4] sm:$0xf]
    %v23 = vld [vmem:[%s1 + $0x8] sm:$0xf]
    %v24 = vld [vmem:[%s1 + $0xc] sm:$0xf]
    %v29 = vunpack.c.l.b16 %v21
    %v30 = vunpack.c.l.b16 %v22
    %v31 = vunpack.c.l.b16 %v23
    %v32 = vunpack.c.l.b16 %v24
    %v33 = vpack.c.b16 %v30, %v29
    %v34 = vpack.c.b16 %v32, %v31
    %vm37 = vcmask 261120
    %v39 = vsel %vm37, %v20, 0
    %41 = vmatpush.bf16.msra.mxu0 0
    %42 = vmatpush.bf16.msra.mxu0 0
    %43 = vmatpush.bf16.msra.mxu0 0
    %44 = vmatpush.bf16.msra.mxu0 0
    %45 = vmatpush.bf16.msra.mxu0 0
    %46 = vmatpush.bf16.msra.mxu0 0
    %47 = vmatpush.bf16.msra.mxu0 %v34
    %48 = vmatpush.bf16.msra.mxu0 %v33
    %49 = vmatmul.bf16.gmra.mxu0 %v39
    %v50 = vpop.f32.mrf.mxu0
    %v51 = vadd.f32 0.0, %v50
    %v52 = vpop.f32.mrf.mxu0
    %53 = vdwg.mxu0
    %v54 = vrot.slane %v51, 4
    %v55 = vadd.f32 %v51, %v54
    %v56 = vrot.slane %v55, 2
    %v57 = vadd.f32 %v55, %v56
    %v58 = vrot.slane %v57, 1
    %v59 = vadd.f32 %v57, %v58
    %v60 = vmul.f32 %v59, 0.125
    %v61 = vmul.f32 %v51, %v51
    %v62 = vrot.slane %v61, 4
    %v63 = vadd.f32 %v61, %v62
    %v64 = vrot.slane %v63, 2
    %v65 = vadd.f32 %v63, %v64
    %v66 = vrot.slane %v65, 1
    %v67 = vadd.f32 %v65, %v66
    %v68 = vmul.f32 %v67, 0.125
    %v69 = vmul.f32 %v60, %v60
    %v70 = vsub.f32 %v68, %v69
    %v71 = vmax.f32 %v70, 0.0
    %v72 = vadd.f32 %v71, 1e-05
    %v73 = vrsqrt.pop %v72
    %v74 = vmul.f32 %v73, %v72
    %v75 = vmul.f32 %v74, %v73
    %v76 = vmul.f32 0.5, %v75
    %v77 = vsub.f32 1.5, %v76
    %v78 = vmul.f32 %v73, %v77
    %vm79 = vweird.f32 %v72
    %vm80 = vweird.f32 %v73
    %vm81 = vmor %vm79, %vm80
    %v82 = vsel %vm81, %v73, %v78
    %v83 = vld [vmem:[%s2] sm:$0x1]
    %v84 = vld [vmem:[%s2 + $0x1] sm:$0x1]
    %v85 = vmul.f32 %v82, %v83
    %v86 = vmul.f32 %v60, %v85
    %v87 = vsub.f32 %v84, %v86
    %v88 = vperm.slane %v85, 0
    %v89 = vmul.f32 %v51, %v88
    %v90 = vperm.slane %v87, 0
    %v91 = vadd.f32 %v89, %v90
    %v92 = vmul.f32 %v91, 0.01
    %v93 = vmax.f32 %v91, %v92
    %v94 = vpack.c.bf16 %v93, %v93
    %v95 = vld [vmem:[%s3] sm:$0xf]
    %v96 = vld [vmem:[%s3 + $0x4] sm:$0xf]
    %v97 = vld [vmem:[%s3 + $0x8] sm:$0xf]
    %v98 = vld [vmem:[%s3 + $0xc] sm:$0xf]
    %v99 = vld [vmem:[%s3 + $0x10] sm:$0xf]
    %v100 = vld [vmem:[%s3 + $0x14] sm:$0xf]
    %v101 = vld [vmem:[%s3 + $0x18] sm:$0xf]
    %v102 = vld [vmem:[%s3 + $0x1c] sm:$0xf]
    %v103 = vld [vmem:[%s3 + $0x20] sm:$0xf]
    %v104 = vld [vmem:[%s3 + $0x24] sm:$0xf]
    %v105 = vld [vmem:[%s3 + $0x28] sm:$0xf]
    %v106 = vld [vmem:[%s3 + $0x2c] sm:$0xf]
    %v107 = vld [vmem:[%s3 + $0x30] sm:$0xf]
    %v108 = vld [vmem:[%s3 + $0x34] sm:$0xf]
    %v109 = vld [vmem:[%s3 + $0x38] sm:$0xf]
    %v110 = vld [vmem:[%s3 + $0x3c] sm:$0xf]
    %v111 = vld [vmem:[%s2 + $0x2] sm:$0x1]
    %v112 = vperm.slane %v111, 0
    %v129 = vunpack.c.l.b16 %v95
    %v130 = vunpack.c.l.b16 %v96
    %v131 = vunpack.c.l.b16 %v97
    %v132 = vunpack.c.l.b16 %v98
    %v133 = vunpack.c.l.b16 %v99
    %v134 = vunpack.c.l.b16 %v100
    %v135 = vunpack.c.l.b16 %v101
    %v136 = vunpack.c.l.b16 %v102
    %v137 = vunpack.c.l.b16 %v103
    %v138 = vunpack.c.l.b16 %v104
    %v139 = vunpack.c.l.b16 %v105
    %v140 = vunpack.c.l.b16 %v106
    %v141 = vunpack.c.l.b16 %v107
    %v142 = vunpack.c.l.b16 %v108
    %v143 = vunpack.c.l.b16 %v109
    %v144 = vunpack.c.l.b16 %v110
    %v145 = vpack.c.b16 %v130, %v129
    %v146 = vpack.c.b16 %v132, %v131
    %v147 = vpack.c.b16 %v134, %v133
    %v148 = vpack.c.b16 %v136, %v135
    %v149 = vpack.c.b16 %v138, %v137
    %v150 = vpack.c.b16 %v140, %v139
    %v151 = vpack.c.b16 %v142, %v141
    %v152 = vpack.c.b16 %v144, %v143
    %161 = vmatpush.bf16.msra.mxu0 %v152
    %162 = vmatpush.bf16.msra.mxu0 %v151
    %163 = vmatpush.bf16.msra.mxu0 %v150
    %164 = vmatpush.bf16.msra.mxu0 %v149
    %165 = vmatpush.bf16.msra.mxu0 %v148
    %166 = vmatpush.bf16.msra.mxu0 %v147
    %167 = vmatpush.bf16.msra.mxu0 %v146
    %168 = vmatpush.bf16.msra.mxu0 %v145
    %169 = vmatmul.bf16.gmra.mxu0 %v94
    %v170 = vpop.f32.mrf.mxu0
    %v171 = vadd.f32 %v112, %v170
    %v172 = vpop.f32.mrf.mxu0
    %173 = vdwg.mxu0
    %vm174 = vcmask 130048
    %175 = vst.msk [vmem:[#allocation2] sm:$0xff] %vm174, %v171
    // Predicated region
    $region18: #{tpu_custom_call.1} parent=1 // pred_check
      _
    $region19: #{tpu_custom_call.1} parent=1 // pred_check_branch
      %177 = sbr.rel (0) target = $region21
    $region20: #{tpu_custom_call.1} parent=1 // pred_region
      %179 = vsyncadd [#allocation3], 0
      %s181 = sshll.u32 [#allocation2], 4
      %s182 = int_to_ptr.vmem [resolvable:$true] %s181
      %s183 = sshll.u32 %s4, 4
      %s184 = int_to_ptr.hbm [resolvable:$true] %s183
      %186 = dma.vmem_to_hbm [thread:$0]  %s182, 128, %s184, [#allocation3]
    $region21: #{tpu_custom_call.1} parent=1 // pred_fallthru
      _
    // Predicated region
    $region22: #{tpu_custom_call.1} parent=1 // pred_check
      _
    $region23: #{tpu_custom_call.1} parent=1 // pred_check_branch
      %188 = sbr.rel (0) target = $region25
    $region24: #{tpu_custom_call.1} parent=1 // pred_region
      %190 = dma.done [#allocation3], 128
    $region25: #{tpu_custom_call.1} parent=1 // pred_fallthru
      _
    %191 = vsyncpa [#allocation3], 1

</llo_original>
